<compile_context>
chip_gen: v5e
topology: v5e:2x2
jax: 0.10.0
libtpu: 0.0.40
codegen_flags: <defaults>
</compile_context>

<pallas_src>
import jax
import jax.numpy as jnp
from jax.experimental import pallas as pl
from jax.experimental.pallas import tpu as pltpu

# -----------------------------------------------------------------------------
# Deterministic parameters (from the PyTorch `weights` dict), baked in as
# Python scalars so the compiler folds them into vector immediates.
# -----------------------------------------------------------------------------
W1_0, W1_1, B1 = 3.4243, 3.4299, -5.3119
W2_0, W2_1, B2 = 4.4863, 4.4830, -1.7982
W3_0, W3_1, B3 = -7.1722, 6.7997, -3.0611

LANE = 128            # lane width (last dim of every tile)
MAX_TILE_R = 2048     # rows of 128 lanes per grid step -> 256K elems/step,
                      # 2 MiB input block + 1 MiB output block (~6 MiB
                      # double-buffered): fits every generation's scoped VMEM.
SMALL_N = 8192        # below this, a single XLA fusion beats a kernel launch


def _mlp_kernel(x_ref, o_ref):
    """x_ref: (2, TILE_R, 128) transposed input block; o_ref: (TILE_R, 128)."""
    x0 = x_ref[0]                                  # (TILE_R, 128) dense tile
    x1 = x_ref[1]                                  # (TILE_R, 128) dense tile
    # Two parallel 2->1 heads: VPU FMAs + one EUP tanh each.
    z1 = x0 * W1_0 + x1 * W1_1 + B1
    z2 = x0 * W2_0 + x1 * W2_1 + B2
    h1 = 0.5 * jnp.tanh(0.5 * z1) + 0.5            # sigmoid(z1)
    h2 = 0.5 * jnp.tanh(0.5 * z2) + 0.5            # sigmoid(z2)
    # Output head: 2->1 sigmoid, dense full-tile store.
    z3 = h1 * W3_0 + h2 * W3_1 + B3
    o_ref[...] = 0.5 * jnp.tanh(0.5 * z3) + 0.5    # sigmoid(z3)


def _mlp_jnp(x):
    """Plain-jnp forward (reference + small-N fast path)."""
    w1 = jnp.array([[W1_0], [W1_1]], dtype=jnp.float32)
    w2 = jnp.array([[W2_0], [W2_1]], dtype=jnp.float32)
    w3 = jnp.array([[W3_0], [W3_1]], dtype=jnp.float32)
    f1 = jax.nn.sigmoid(x @ w1 + B1)
    f2 = jax.nn.sigmoid(x @ w2 + B2)
    return jax.nn.sigmoid(jnp.concatenate([f1, f2], axis=1) @ w3 + B3)


def _choose_tiling(n):
    """Pick (tile_r, rows_pad) for a batch of n elements."""
    rows = pl.cdiv(n, LANE)                        # 128-lane rows needed
    if rows <= 8:
        tile_r = rows                              # full-extent block (tiny N)
    else:
        # At least 2 grid steps so both v7x TensorCores get work under
        # dimension_semantics=("parallel",); cap per-step tile at MAX_TILE_R.
        n_steps = max(2, pl.cdiv(rows, MAX_TILE_R))
        tile_r = min(MAX_TILE_R, pl.cdiv(pl.cdiv(rows, n_steps), 8) * 8)
    rows_pad = pl.cdiv(rows, tile_r) * tile_r
    return tile_r, rows_pad


def custom_model_forward(x: jax.Array, *, use_pallas=None) -> jax.Array:
    """Pallas equivalent of CustomModel.forward.  x: (N, 2) f32 -> (N, 1) f32."""
    x = x.astype(jnp.float32)
    n = x.shape[0]

    if use_pallas is None:
        use_pallas = n >= SMALL_N
    if not use_pallas:
        return _mlp_jnp(x)

    tile_r, rows_pad = _choose_tiling(n)
    n_pad = rows_pad * LANE

    # Layout plumbing stays in the wrapper: transpose + pad + reshape fuse
    # into a single XLA copy; the reshape to (2, rows, 128) is free row-major.
    xt = x.T                                       # (2, N)
    if n_pad != n:
        xt = jnp.pad(xt, ((0, 0), (0, n_pad - n)))
    x3 = xt.reshape(2, rows_pad, LANE)             # (2, rows_pad, 128)

    grid = (rows_pad // tile_r,)

    out3 = pl.pallas_call(
        _mlp_kernel,
        out_shape=jax.ShapeDtypeStruct((rows_pad, LANE), jnp.float32),
        grid=grid,
        in_specs=[pl.BlockSpec((2, tile_r, LANE), lambda i: (0, i, 0))],
        out_specs=pl.BlockSpec((tile_r, LANE), lambda i: (i, 0)),
        compiler_params=pltpu.CompilerParams(
            dimension_semantics=("parallel",),
            vmem_limit_bytes=32 * 1024 * 1024),
        cost_estimate=pl.CostEstimate(
            flops=12 * n, transcendentals=3 * n, bytes_accessed=12 * n),
    )(x3)

    # Back to the public (N, 1) shape (free reshape; slice only when padded).
    return out3.reshape(-1, 1)[:n]


if __name__ == "__main__":
    key = jax.random.PRNGKey(0)

    # Small shape matching the module's expected input (N, 2); force the
    # Pallas path so the kernel itself is exercised.
    x_small = jax.random.normal(key, (8, 2), dtype=jnp.float32)
    out_small = jax.block_until_ready(custom_model_forward(x_small, use_pallas=True))
    assert out_small.shape == (8, 1)
    assert jnp.allclose(out_small, _mlp_jnp(x_small), atol=1e-5, rtol=1e-5)

    # Non-multiple-of-128 batch to exercise the padding / slicing path.
    x_mid = jax.random.normal(jax.random.PRNGKey(1), (300, 2), dtype=jnp.float32)
    out_mid = jax.block_until_ready(custom_model_forward(x_mid, use_pallas=True))
    assert out_mid.shape == (300, 1)
    assert jnp.allclose(out_mid, _mlp_jnp(x_mid), atol=1e-5, rtol=1e-5)

    # Multi-step grid (>= 2 parallel steps) with padding.
    x_big = jax.random.normal(jax.random.PRNGKey(2), (5000, 2), dtype=jnp.float32)
    out_big = jax.block_until_ready(custom_model_forward(x_big, use_pallas=True))
    assert out_big.shape == (5000, 1)
    assert jnp.allclose(out_big, _mlp_jnp(x_big), atol=1e-5, rtol=1e-5)

    # Auto small-N fast path (plain jnp, no pallas_call).
    out_auto = jax.block_until_ready(custom_model_forward(x_small))
    assert jnp.allclose(out_auto, _mlp_jnp(x_small), atol=1e-5, rtol=1e-5)

    print("KERNEL_OK")
</pallas_src>

<mosaic_0001>
module attributes {stable_mosaic.version = 11 : i64} {
  func.func @_mlp_kernel(%arg0: i32, %arg1: memref<2x1x128xf32, #tpu.memory_space<vmem>>, %arg2: memref<1x128xf32, #tpu.memory_space<vmem>>) attributes {dimension_semantics = [#tpu.dimension_semantics<parallel>], iteration_bounds = array<i64: 1>, scalar_prefetch = 0 : i64, scratch_operands = 0 : i64, tpu.core_type = #tpu.core_type<tc>, window_params = [{transform_indices = @transform_0, window_bounds = array<i64: 2, 1, 128>}, {transform_indices = @transform_1, window_bounds = array<i64: 1, 128>}]} {
    %c0 = arith.constant 0 : index
    %c0_0 = arith.constant 0 : index
    %c0_1 = arith.constant 0 : index
    %0 = vector.load %arg1[%c0, %c0_0, %c0_1] : memref<2x1x128xf32, #tpu.memory_space<vmem>>, vector<1x1x128xf32>
    %1 = vector.shape_cast %0 : vector<1x1x128xf32> to vector<1x128xf32>
    %c1 = arith.constant 1 : index
    %c0_2 = arith.constant 0 : index
    %c0_3 = arith.constant 0 : index
    %2 = vector.load %arg1[%c1, %c0_2, %c0_3] : memref<2x1x128xf32, #tpu.memory_space<vmem>>, vector<1x1x128xf32>
    %3 = vector.shape_cast %2 : vector<1x1x128xf32> to vector<1x128xf32>
    %cst = arith.constant 3.424300e+00 : f32
    %4 = vector.broadcast %cst : f32 to vector<1x128xf32>
    %5 = arith.mulf %1, %4 : vector<1x128xf32>
    %cst_4 = arith.constant 3.429900e+00 : f32
    %6 = vector.broadcast %cst_4 : f32 to vector<1x128xf32>
    %7 = arith.mulf %3, %6 : vector<1x128xf32>
    %8 = arith.addf %5, %7 : vector<1x128xf32>
    %cst_5 = arith.constant -5.311900e+00 : f32
    %9 = vector.broadcast %cst_5 : f32 to vector<1x128xf32>
    %10 = arith.addf %8, %9 : vector<1x128xf32>
    %cst_6 = arith.constant 4.486300e+00 : f32
    %11 = vector.broadcast %cst_6 : f32 to vector<1x128xf32>
    %12 = arith.mulf %1, %11 : vector<1x128xf32>
    %cst_7 = arith.constant 4.483000e+00 : f32
    %13 = vector.broadcast %cst_7 : f32 to vector<1x128xf32>
    %14 = arith.mulf %3, %13 : vector<1x128xf32>
    %15 = arith.addf %12, %14 : vector<1x128xf32>
    %cst_8 = arith.constant -1.798200e+00 : f32
    %16 = vector.broadcast %cst_8 : f32 to vector<1x128xf32>
    %17 = arith.addf %15, %16 : vector<1x128xf32>
    %cst_9 = arith.constant 5.000000e-01 : f32
    %18 = vector.broadcast %cst_9 : f32 to vector<1x128xf32>
    %19 = arith.mulf %18, %10 : vector<1x128xf32>
    %20 = math.tanh %19 : vector<1x128xf32>
    %cst_10 = arith.constant 5.000000e-01 : f32
    %21 = vector.broadcast %cst_10 : f32 to vector<1x128xf32>
    %22 = arith.mulf %21, %20 : vector<1x128xf32>
    %cst_11 = arith.constant 5.000000e-01 : f32
    %23 = vector.broadcast %cst_11 : f32 to vector<1x128xf32>
    %24 = arith.addf %22, %23 : vector<1x128xf32>
    %cst_12 = arith.constant 5.000000e-01 : f32
    %25 = vector.broadcast %cst_12 : f32 to vector<1x128xf32>
    %26 = arith.mulf %25, %17 : vector<1x128xf32>
    %27 = math.tanh %26 : vector<1x128xf32>
    %cst_13 = arith.constant 5.000000e-01 : f32
    %28 = vector.broadcast %cst_13 : f32 to vector<1x128xf32>
    %29 = arith.mulf %28, %27 : vector<1x128xf32>
    %cst_14 = arith.constant 5.000000e-01 : f32
    %30 = vector.broadcast %cst_14 : f32 to vector<1x128xf32>
    %31 = arith.addf %29, %30 : vector<1x128xf32>
    %cst_15 = arith.constant -7.172200e+00 : f32
    %32 = vector.broadcast %cst_15 : f32 to vector<1x128xf32>
    %33 = arith.mulf %24, %32 : vector<1x128xf32>
    %cst_16 = arith.constant 6.799700e+00 : f32
    %34 = vector.broadcast %cst_16 : f32 to vector<1x128xf32>
    %35 = arith.mulf %31, %34 : vector<1x128xf32>
    %36 = arith.addf %33, %35 : vector<1x128xf32>
    %cst_17 = arith.constant -3.061100e+00 : f32
    %37 = vector.broadcast %cst_17 : f32 to vector<1x128xf32>
    %38 = arith.addf %36, %37 : vector<1x128xf32>
    %cst_18 = arith.constant 5.000000e-01 : f32
    %39 = vector.broadcast %cst_18 : f32 to vector<1x128xf32>
    %40 = arith.mulf %39, %38 : vector<1x128xf32>
    %41 = math.tanh %40 : vector<1x128xf32>
    %cst_19 = arith.constant 5.000000e-01 : f32
    %42 = vector.broadcast %cst_19 : f32 to vector<1x128xf32>
    %43 = arith.mulf %42, %41 : vector<1x128xf32>
    %cst_20 = arith.constant 5.000000e-01 : f32
    %44 = vector.broadcast %cst_20 : f32 to vector<1x128xf32>
    %45 = arith.addf %43, %44 : vector<1x128xf32>
    %c0_21 = arith.constant 0 : index
    %c0_22 = arith.constant 0 : index
    %46 = vector.load %arg2[%c0_21, %c0_22] : memref<1x128xf32, #tpu.memory_space<vmem>>, vector<1x128xf32>
    tpu.vector_store %arg2[%c0_21, %c0_22], %45 {strides = array<i32>} : memref<1x128xf32, #tpu.memory_space<vmem>>, vector<1x128xf32>,
    return
  }
  func.func @transform_0(%arg0: i32) -> (i32, i32, i32) {
    %c0_i32 = arith.constant 0 : i32
    %c0_i32_0 = arith.constant 0 : i32
    %c0_i32_1 = arith.constant 0 : i32
    return %c0_i32, %arg0, %c0_i32_0 : i32, i32, i32
  }
  func.func @transform_1(%arg0: i32) -> (i32, i32) {
    %c0_i32 = arith.constant 0 : i32
    %c0_i32_0 = arith.constant 0 : i32
    return %arg0, %c0_i32 : i32, i32
  }
}

</mosaic_0001>

<llo_original>
// kernel: tpu_custom_call.1
$region0: #{tpu_custom_call.1}
  #allocation0 [shape = 'u32[]', space=smem, size = 0x4, offset = 0x4, fixed_abs, tag = 'smem constant byte address 0x4 - core index']
  #allocation1 [shape = 'u32[72,128]{1,0:T(1,128)}', space=vmem, size = 0x9000, scoped, tag = 'internal scratch']
  %s0 = inlined_call_operand.hbm [shape: f32[2,1,128], index: 0, kind: input, shape index: {}]
  %s1 = inlined_call_operand.hbm [shape: f32[1,128], index: 1, kind: output, shape index: {}]
  %s2 = sld [smem:[#allocation0]]
  $region18: #{tpu_custom_call.1} parent=0
    _
  %s4 = ssub.s32 1, %s2
  %s5 = scalar_select 0, %s4, %s2
  $region1: #{tpu_custom_call.1} parent=0
    #allocation2 [shape = 'u8[1024]{0}', space=vmem, size = 0x400, scoped, tag = 'input window, operand 0, single buffered']
    #allocation3 [shape = 's32[1]{0}', space=sflag, size = 0x4, scoped, tag = 'scoped memory for tpu_custom_call.1']
    #allocation4 [shape = 's32[1]{0}', space=sflag, size = 0x4, scoped, tag = 'scoped memory for tpu_custom_call.1']
    #allocation5 [shape = 'u8[512]{0}', space=vmem, size = 0x400, scoped, tag = 'output window, operand 0, single buffered']
    %6 = vsyncpa [#allocation3], 0
    %7 = vsyncpa [#allocation4], 0
    // Predicated region
    $region2: #{tpu_custom_call.1} parent=1 // pred_check
      _
    $region3: #{tpu_custom_call.1} parent=1 // pred_check_branch
      %9 = sbr.rel (0) target = $region5
    $region4: #{tpu_custom_call.1} parent=1 // pred_region
      %11 = vsyncadd [#allocation3], 0
      %s12 = sshll.u32 %s0, 4
      %s13 = int_to_ptr.hbm [resolvable:$true] %s12
      %s14 = sshll.u32 [#allocation2], 4
      %s15 = int_to_ptr.vmem [resolvable:$true] %s14
      %20 = dma.hbm_to_vmem [thread:$0]  %s13, 32, %s15, [#allocation3], 16, 16, 1
    $region5: #{tpu_custom_call.1} parent=1 // pred_fallthru
      _
    // Predicated region
    $region6: #{tpu_custom_call.1} parent=1 // pred_check
      _
    $region7: #{tpu_custom_call.1} parent=1 // pred_check_branch
      %22 = sbr.rel (0) target = $region9
    $region8: #{tpu_custom_call.1} parent=1 // pred_region
      %24 = dma.done [#allocation3], 32
    $region9: #{tpu_custom_call.1} parent=1 // pred_fallthru
      _
    %v25 = vld [vmem:[#allocation2] sm:$0x1]
    %s26 = scalar_lea.vmem [#allocation2], 1
    %v27 = vld [vmem:[%s26] sm:$0x1]
    %v28 = vmul.f32 %v25, 3.4243
    %v29 = vmul.f32 %v27, 3.4299
    %v30 = vadd.f32 %v28, %v29
    %v31 = vadd.f32 %v30, -5.3119
    %v32 = vmul.f32 %v25, 4.4863
    %v33 = vmul.f32 %v27, 4.483
    %v34 = vadd.f32 %v32, %v33
    %v35 = vadd.f32 %v34, -1.7982
    %v36 = vmul.f32 %v31, 0.5
    %v37 = vtanh.pop %v36
    %v38 = vmul.f32 %v37, 0.5
    %v39 = vadd.f32 %v38, 0.5
    %v40 = vmul.f32 %v35, 0.5
    %v41 = vtanh.pop %v40
    %v42 = vmul.f32 %v41, 0.5
    %v43 = vadd.f32 %v42, 0.5
    %v44 = vmul.f32 %v39, -7.1722
    %v45 = vmul.f32 %v43, 6.7997
    %v46 = vadd.f32 %v44, %v45
    %v47 = vadd.f32 %v46, -3.0611
    %v48 = vmul.f32 %v47, 0.5
    %v49 = vtanh.pop %v48
    %v50 = vmul.f32 %v49, 0.5
    %v51 = vadd.f32 %v50, 0.5
    %52 = vst [vmem:[#allocation5] sm:$0x1] %v51
    // Predicated region
    $region10: #{tpu_custom_call.1} parent=1 // pred_check
      _
    $region11: #{tpu_custom_call.1} parent=1 // pred_check_branch
      %54 = sbr.rel (0) target = $region13
    $region12: #{tpu_custom_call.1} parent=1 // pred_region
      %56 = vsyncadd [#allocation4], 0
      %s58 = sshll.u32 [#allocation5], 4
      %s59 = int_to_ptr.vmem [resolvable:$true] %s58
      %s60 = sshll.u32 %s1, 4
      %s61 = int_to_ptr.hbm [resolvable:$true] %s60
      %63 = dma.vmem_to_hbm [thread:$0]  %s59, 16, %s61, [#allocation4]
    $region13: #{tpu_custom_call.1} parent=1 // pred_fallthru
      _
    // Predicated region
    $region14: #{tpu_custom_call.1} parent=1 // pred_check
      _
    $region15: #{tpu_custom_call.1} parent=1 // pred_check_branch
      %65 = sbr.rel (0) target = $region17
    $region16: #{tpu_custom_call.1} parent=1 // pred_region
      %67 = dma.done [#allocation4], 16
    $region17: #{tpu_custom_call.1} parent=1 // pred_fallthru
      _
    %68 = vsyncpa [#allocation3], 1
    %69 = vsyncpa [#allocation4], 1

</llo_original>
